<compile_context>
chip_gen: v6e
topology: v6e:2x2x1
jax: 0.10.0
libtpu: 0.0.40
codegen_flags: <defaults>
</compile_context>

<pallas_src>
import jax
import jax.numpy as jnp
from jax.experimental import pallas as pl
from jax.experimental.pallas import tpu as pltpu

D_IN = 1024  # fixed by the module: Conv1d(in_channels=1024, ...)

_VMEM_TARGET = 48 << 20  # conservative cross-generation budget (v7x: 64 MiB/TC)


def _embed_kernel(x_ref, w_ref, b_ref, o_ref, y_ref):
    """Grid step (b, l_tile, v): compute x_tile @ w + bias once (v == 0) into a
    local value, store it to both the scratch and the v=0 output tile; for
    v != 0 just replay the cached scratch into the v-th replica's tile."""
    v = pl.program_id(2)

    @pl.when(v == 0)
    def _():
        acc = (
            jnp.dot(
                x_ref[...].astype(jnp.bfloat16),   # in-kernel cast: no extra HBM pass
                w_ref[...],
                preferred_element_type=jnp.float32,
            )
            + b_ref[...]
        ).astype(o_ref.dtype)
        y_ref[...] = acc
        o_ref[...] = acc

    @pl.when(v != 0)
    def _():
        o_ref[...] = y_ref[...]


def _round_up(x, m):
    return ((x + m - 1) // m) * m


def _vmem_bytes(tm, d_model, out_bytes):
    """Approximate VMEM working set (double-buffered pipeline buffers + scratch)."""
    d_pad = _round_up(d_model, 128)          # VMEM lane padding
    x_blk = 2 * tm * D_IN * 4                # f32 x tile
    w_blk = 2 * D_IN * d_pad * 2             # bf16 weight (constant index, still 2 bufs)
    b_blk = 2 * 8 * d_pad * 4                # bias (sublane-padded)
    o_blk = 2 * tm * d_pad * out_bytes       # output tile
    scr = tm * d_pad * out_bytes             # scratch
    return x_blk + w_blk + b_blk + o_blk + scr


def _choose_tiling(B, L, d_model, out_bytes, tm_max=512):
    """Pick (tm, padded_L).  tm is a multiple of 8 (or == L), sized for VMEM."""
    if L <= tm_max:
        tm, lp = L, L                        # single L tile: block dim == full dim
    else:
        tm = 0
        for t in range(tm_max, 7, -1):
            if t % 8 == 0 and L % t == 0:
                tm = t
                break
        if tm:
            lp = L
        else:
            # Awkward L (e.g. large prime): pad so an 8-aligned big tile exists.
            tm = tm_max
            lp = _round_up(L, tm)

    # v7x megacore: keep >= 2 parallel (B, L-tile) units when we can halve tm.
    while B * (lp // tm) < 2 and tm % 16 == 0:
        tm //= 2
    # Shrink until the double-buffered working set fits the cross-gen budget.
    while _vmem_bytes(tm, d_model, out_bytes) > _VMEM_TARGET and tm % 16 == 0:
        tm //= 2
    return tm, lp


def text_embedding_forward(x, conv_w, conv_b, n_vars, *, out_dtype=jnp.float32,
                           tm_max=512):
    """x: (B, L, 1024), conv_w: (d_model, 1024) (Conv1d weight, k-dim squeezed),
    conv_b: (d_model,) -> (B * n_vars, L, d_model)."""
    B, L, D = x.shape
    assert D == D_IN, f"expected channel dim {D_IN}, got {D}"
    d_model = conv_w.shape[0]
    out_bytes = jnp.dtype(out_dtype).itemsize

    tm, lp = _choose_tiling(B, L, d_model, out_bytes, tm_max)
    if lp != L:
        # Fallback only for awkward L: one pad pass over x + a final slice of y.
        x = jnp.pad(x, ((0, 0), (0, lp - L), (0, 0)))

    # Weight: (d_model, 1024) -> (1024, d_model) in bf16 (tiny one-off cast,
    # resident in VMEM, feeds the bf16 MXU).  Bias stays f32 (added post-acc).
    w_bf = conv_w.T.astype(jnp.bfloat16)
    b = conv_b.reshape(1, d_model).astype(jnp.float32)

    grid = (B, lp // tm, n_vars)
    budget = _vmem_bytes(tm, d_model, out_bytes)
    vmem_limit = int(min(max(budget + (4 << 20), 32 << 20), 56 << 20))

    y = pl.pallas_call(
        _embed_kernel,
        out_shape=jax.ShapeDtypeStruct((B * n_vars, lp, d_model), out_dtype),
        grid_spec=pltpu.PrefetchScalarGridSpec(
            num_scalar_prefetch=0,
            grid=grid,
            in_specs=[
                # x tile: (tm, 1024); index constant over v -> fetched once per
                # (b, l-tile), re-fetch elided across the replica axis.
                pl.BlockSpec((None, tm, D_IN), lambda bb, lt, v: (bb, lt, 0)),
                # full weight, resident in VMEM (last dim == full array dim).
                pl.BlockSpec((D_IN, d_model), lambda bb, lt, v: (0, 0)),
                # bias, resident.
                pl.BlockSpec((1, d_model), lambda bb, lt, v: (0, 0)),
            ],
            # replica v of batch bb lives at row (bb * n_vars + v); last dim is
            # d_model (== full dim) so there is no pad-then-slice pass.
            out_specs=pl.BlockSpec(
                (None, tm, d_model),
                lambda bb, lt, v: (bb * n_vars + v, lt, 0),
            ),
            scratch_shapes=[pltpu.VMEM((tm, d_model), out_dtype)],
        ),
        compiler_params=pltpu.CompilerParams(
            dimension_semantics=("parallel", "parallel", "arbitrary"),
            vmem_limit_bytes=vmem_limit,
        ),
    )(x, w_bf, b)

    if lp != L:
        y = y[:, :L, :]
    return y


if __name__ == "__main__":
    # Small but module-consistent shapes: channel dim is pinned to 1024.
    B, L = 2, 8
    d_model, n_vars = 32, 3

    key = jax.random.PRNGKey(0)
    kx, kw, kb = jax.random.split(key, 3)

    x = jax.random.normal(kx, (B, L, D_IN), dtype=jnp.float32)
    # Conv1d weight is (d_model, 1024, 1); kernel dim squeezed here.
    conv_w = jax.random.normal(kw, (d_model, D_IN), dtype=jnp.float32) * 0.02
    conv_b = jax.random.normal(kb, (d_model,), dtype=jnp.float32) * 0.02

    out = text_embedding_forward(x, conv_w, conv_b, n_vars)
    out = jax.block_until_ready(out)

    # Reference forward pass in plain JAX (f32).  The kernel uses bf16 MXU
    # inputs with f32 accumulation, hence the loose tolerance.
    ref = jnp.einsum("bld,dn->bln", x, conv_w.T) + conv_b
    ref = jnp.broadcast_to(ref[:, None, :, :], (B, n_vars, L, d_model)).reshape(
        B * n_vars, L, d_model
    )
    assert out.shape == (B * n_vars, L, d_model)
    assert bool(jnp.allclose(out, ref, atol=2e-2, rtol=2e-2))

    print("KERNEL_OK")
</pallas_src>

<mosaic_0001>
module attributes {stable_mosaic.version = 11 : i64} {
  func.func @_embed_kernel(%arg0: i32, %arg1: i32, %arg2: i32, %arg3: memref<1x8x1024xf32, #tpu.memory_space<vmem>>, %arg4: memref<1024x32xbf16, #tpu.memory_space<vmem>>, %arg5: memref<1x32xf32, #tpu.memory_space<vmem>>, %arg6: memref<1x8x32xf32, #tpu.memory_space<vmem>>, %arg7: memref<8x32xf32, #tpu.memory_space<vmem>>) attributes {dimension_semantics = [#tpu.dimension_semantics<parallel>, #tpu.dimension_semantics<parallel>, #tpu.dimension_semantics<arbitrary>], iteration_bounds = array<i64: 2, 1, 3>, scalar_prefetch = 0 : i64, scratch_operands = 1 : i64, tpu.core_type = #tpu.core_type<tc>, window_params = [{transform_indices = @transform_0, window_bounds = array<i64: 1, 8, 1024>}, {pipeline_mode = #tpu.pipeline_mode<synchronous>, transform_indices = @transform_1, window_bounds = array<i64: 1024, 32>}, {pipeline_mode = #tpu.pipeline_mode<synchronous>, transform_indices = @transform_2, window_bounds = array<i64: 1, 32>}, {transform_indices = @transform_3, window_bounds = array<i64: 1, 8, 32>}]} {
    %c0_i32 = arith.constant 0 : i32
    %0 = arith.cmpi eq, %arg2, %c0_i32 : i32
    %1 = arith.extui %0 : i1 to i32
    %c0_i32_0 = arith.constant 0 : i32
    %2 = arith.cmpi ne, %1, %c0_i32_0 : i32
    scf.if %2 {
      %c0 = arith.constant 0 : index
      %c0_3 = arith.constant 0 : index
      %c0_4 = arith.constant 0 : index
      %6 = vector.load %arg3[%c0, %c0_3, %c0_4] : memref<1x8x1024xf32, #tpu.memory_space<vmem>>, vector<1x8x1024xf32>
      %7 = vector.shape_cast %6 : vector<1x8x1024xf32> to vector<8x1024xf32>
      %8 = arith.truncf %7 : vector<8x1024xf32> to vector<8x1024xbf16>
      %c0_5 = arith.constant 0 : index
      %c0_6 = arith.constant 0 : index
      %9 = vector.load %arg4[%c0_5, %c0_6] : memref<1024x32xbf16, #tpu.memory_space<vmem>>, vector<1024x32xbf16>
      %cst = arith.constant dense<0.000000e+00> : vector<8x32xf32>
      %10 = tpu.matmul %8, %9, %cst {dimension_numbers = #tpu.dot_dimension_numbers<[1], [0], [0], [1], [0, 0, 1, 1], [], []>} : vector<8x1024xbf16>, vector<1024x32xbf16>, vector<8x32xf32> -> vector<8x32xf32>
      %c0_7 = arith.constant 0 : index
      %c0_8 = arith.constant 0 : index
      %11 = vector.load %arg5[%c0_7, %c0_8] : memref<1x32xf32, #tpu.memory_space<vmem>>, vector<1x32xf32>
      %12 = vector.broadcast %11 : vector<1x32xf32> to vector<8x32xf32>
      %13 = arith.addf %10, %12 : vector<8x32xf32>
      %c0_9 = arith.constant 0 : index
      %c0_10 = arith.constant 0 : index
      %14 = vector.load %arg7[%c0_9, %c0_10] : memref<8x32xf32, #tpu.memory_space<vmem>>, vector<8x32xf32>
      tpu.vector_store %arg7[%c0_9, %c0_10], %13 {strides = array<i32>} : memref<8x32xf32, #tpu.memory_space<vmem>>, vector<8x32xf32>,
      %c0_11 = arith.constant 0 : index
      %c0_12 = arith.constant 0 : index
      %c0_13 = arith.constant 0 : index
      %15 = vector.load %arg6[%c0_11, %c0_12, %c0_13] : memref<1x8x32xf32, #tpu.memory_space<vmem>>, vector<1x8x32xf32>
      %16 = vector.shape_cast %15 : vector<1x8x32xf32> to vector<8x32xf32>
      %17 = vector.shape_cast %13 : vector<8x32xf32> to vector<1x8x32xf32>
      tpu.vector_store %arg6[%c0_11, %c0_12, %c0_13], %17 {strides = array<i32>} : memref<1x8x32xf32, #tpu.memory_space<vmem>>, vector<1x8x32xf32>,
    } else {
    }
    %c0_i32_1 = arith.constant 0 : i32
    %3 = arith.cmpi ne, %arg2, %c0_i32_1 : i32
    %4 = arith.extui %3 : i1 to i32
    %c0_i32_2 = arith.constant 0 : i32
    %5 = arith.cmpi ne, %4, %c0_i32_2 : i32
    scf.if %5 {
      %c0 = arith.constant 0 : index
      %c0_3 = arith.constant 0 : index
      %6 = vector.load %arg7[%c0, %c0_3] : memref<8x32xf32, #tpu.memory_space<vmem>>, vector<8x32xf32>
      %c0_4 = arith.constant 0 : index
      %c0_5 = arith.constant 0 : index
      %c0_6 = arith.constant 0 : index
      %7 = vector.load %arg6[%c0_4, %c0_5, %c0_6] : memref<1x8x32xf32, #tpu.memory_space<vmem>>, vector<1x8x32xf32>
      %8 = vector.shape_cast %7 : vector<1x8x32xf32> to vector<8x32xf32>
      %9 = vector.shape_cast %6 : vector<8x32xf32> to vector<1x8x32xf32>
      tpu.vector_store %arg6[%c0_4, %c0_5, %c0_6], %9 {strides = array<i32>} : memref<1x8x32xf32, #tpu.memory_space<vmem>>, vector<1x8x32xf32>,
    } else {
    }
    return
  }
  func.func @transform_0(%arg0: i32, %arg1: i32, %arg2: i32) -> (i32, i32, i32) {
    %c0_i32 = arith.constant 0 : i32
    %c0_i32_0 = arith.constant 0 : i32
    return %arg0, %arg1, %c0_i32 : i32, i32, i32
  }
  func.func @transform_1(%arg0: i32, %arg1: i32, %arg2: i32) -> (i32, i32) {
    %c0_i32 = arith.constant 0 : i32
    %c0_i32_0 = arith.constant 0 : i32
    %c0_i32_1 = arith.constant 0 : i32
    return %c0_i32, %c0_i32_0 : i32, i32
  }
  func.func @transform_2(%arg0: i32, %arg1: i32, %arg2: i32) -> (i32, i32) {
    %c0_i32 = arith.constant 0 : i32
    %c0_i32_0 = arith.constant 0 : i32
    %c0_i32_1 = arith.constant 0 : i32
    return %c0_i32, %c0_i32_0 : i32, i32
  }
  func.func @transform_3(%arg0: i32, %arg1: i32, %arg2: i32) -> (i32, i32, i32) {
    %c3_i32 = arith.constant 3 : i32
    %0 = arith.muli %arg0, %c3_i32 : i32
    %1 = arith.addi %0, %arg2 : i32
    %c0_i32 = arith.constant 0 : i32
    %c0_i32_0 = arith.constant 0 : i32
    return %1, %arg1, %c0_i32 : i32, i32, i32
  }
}

</mosaic_0001>

<llo_original>
// kernel: tpu_custom_call.1
$region0: #{tpu_custom_call.1}
  #allocation0 [shape = 'u32[]', space=smem, size = 0x4, offset = 0x4, fixed_abs, tag = 'smem constant byte address 0x4 - core index']
  #allocation1 [shape = 'u32[144,128]{1,0:T(1,128)}', space=vmem, size = 0x12000, scoped, tag = 'internal scratch']
  #allocation2 [shape = 'f32[8,32]{1,0:T(8,128)}', space=vmem, size = 0x1000, scoped, tag = 'scratch operand']
  %s0 = inlined_call_operand.vmem [shape: f32[2,8,1024], index: 0, kind: input, shape index: {}]
  %s1 = inlined_call_operand.vmem [shape: bf16[1024,32], index: 1, kind: input, shape index: {}]
  %s2 = inlined_call_operand.vmem [shape: f32[1,32], index: 2, kind: input, shape index: {}]
  %s3 = inlined_call_operand.hbm [shape: f32[6,8,32], index: 3, kind: output, shape index: {}]
  %s4 = sld [smem:[#allocation0]]
  $region53: #{tpu_custom_call.1} parent=0
    _
  %s6 = ssub.s32 1, %s4
  %s7 = scalar_select 0, %s6, %s4
  $region1: #{tpu_custom_call.1} parent=0
    #allocation3 [shape = 'u8[8192]{0}', space=vmem, size = 0x2000, scoped, tag = 'output window, operand 0']
    #allocation4 [shape = 's32[2]{0}', space=sflag, size = 0x8, scoped, tag = 'scoped memory for tpu_custom_call.1']
    %8 = vsyncpa [#allocation4], 0
    %s9 = scalar_lea.sflag [#allocation4], 1
    %10 = vsyncpa %s9, 0
    loop: start=0, step=1, limit=8
    $region2: #{tpu_custom_call.1} parent=1 // loop_pre_header
      _
    $region3: #{tpu_custom_call.1} parent=1 // loop_header
      %s12 = sphi 0, %s16
      %p13 = scmp.ge.s32.totalorder %s12, 8
      %s19 = sphi 0, %s38
      %s20 = sphi 0, %s34
      %s21 = sphi 0, %s30
      %s22 = sphi 0, %s19
      %s23 = sphi 0, %s20
      %s24 = sphi 0, %s21
      %s25 = sphi 0, %s22
      %s26 = sphi 0, %s23
      %s27 = sphi 0, %s24
      %s43 = sphi 0, %s45
      %s46 = sphi 0, %s43
      %s47 = sphi 0, %s46
      %s63 = sphi 0, %s47
      %s67 = sphi 0, %s67
      %s69 = sphi 0, %s67
      %s70 = sphi 0, %s69
      %s84 = sphi 0, %s70
      %s88 = sphi 0, %s88
      %s90 = sphi 0, %s88
      %s91 = sphi 0, %s90
      %s105 = sphi 0, %s91
      %s117 = sphi 0, %s119
      %s120 = sphi 0, %s117
      %s121 = sphi 0, %s120
      %s137 = sphi 0, %s121
    $region4: #{tpu_custom_call.1} parent=1 // loop_header_branch
      %15 = sbr.rel (%p13) target = $region8
    $region5: #{tpu_custom_call.1} parent=1 // loop_body
      %s17 = ssub.s32 %s12, 1
      %s18 = ssub.s32 %s12, 2
      %s28 = sadd.s32 1, %s21
      %p29 = scmp.ge.s32.totalorder %s28, 3
      %s30 = scalar_select %p29, 0, %s28
      %s31 = sadd.s32 1, %s20
      %s32 = scalar_select %p29, %s31, %s20
      %p33 = scmp.ge.s32.totalorder %s32, 1
      %s34 = scalar_select %p33, 0, %s32
      %s35 = sadd.s32 1, %s19
      %s36 = scalar_select %p33, %s35, %s19
      %p37 = scmp.ge.s32.totalorder %s36, 2
      %s38 = scalar_select %p37, 0, %s36
      %s39 = ssub.s32 %s19, %s38
      %s40 = ssub.s32 %s20, %s34
      %s41 = sor.u32 %s39, %s40
      %p42 = scmp.eq.s32.totalorder %s41, 0
      %s44 = sadd.s32 %s43, 1
      %s45 = scalar_select %p42, %s43, %s44
      %p48 = pneg %p42
      %p49 = scmp.eq.s32.totalorder %s12, 5
      %p50 = por %p48, %p49
      %p51 = scmp.ne.s32.totalorder %s43, %s46
      %p52 = scmp.eq.s32.totalorder %s12, 0
      %p53 = por %p51, %p52
      %p54 = scmp.ne.s32.totalorder %s43, %s46
      %p55 = scmp.eq.s32.totalorder %s17, 5
      %p56 = por %p54, %p55
      %p57 = scmp.ne.s32.totalorder %s46, %s47
      %p58 = scmp.eq.s32.totalorder %s17, 0
      %p59 = por %p57, %p58
      %p60 = scmp.ne.s32.totalorder %s46, %s47
      %p61 = scmp.eq.s32.totalorder %s18, 5
      %p62 = por %p60, %p61
      %p64 = scmp.ne.s32.totalorder %s47, %s63
      %p65 = scmp.eq.s32.totalorder %s18, 0
      %p66 = por %p64, %p65
      %s68 = sadd.s32 %s67, 1
      %p71 = scmp.eq.s32.totalorder %s12, 5
      %p72 = scmp.ne.s32.totalorder %s67, %s69
      %p73 = scmp.eq.s32.totalorder %s12, 0
      %p74 = por %p72, %p73
      %p75 = scmp.ne.s32.totalorder %s67, %s69
      %p76 = scmp.eq.s32.totalorder %s17, 5
      %p77 = por %p75, %p76
      %p78 = scmp.ne.s32.totalorder %s69, %s70
      %p79 = scmp.eq.s32.totalorder %s17, 0
      %p80 = por %p78, %p79
      %p81 = scmp.ne.s32.totalorder %s69, %s70
      %p82 = scmp.eq.s32.totalorder %s18, 5
      %p83 = por %p81, %p82
      %p85 = scmp.ne.s32.totalorder %s70, %s84
      %p86 = scmp.eq.s32.totalorder %s18, 0
      %p87 = por %p85, %p86
      %s89 = sadd.s32 %s88, 1
      %p92 = scmp.eq.s32.totalorder %s12, 5
      %p93 = scmp.ne.s32.totalorder %s88, %s90
      %p94 = scmp.eq.s32.totalorder %s12, 0
      %p95 = por %p93, %p94
      %p96 = scmp.ne.s32.totalorder %s88, %s90
      %p97 = scmp.eq.s32.totalorder %s17, 5
      %p98 = por %p96, %p97
      %p99 = scmp.ne.s32.totalorder %s90, %s91
      %p100 = scmp.eq.s32.totalorder %s17, 0
      %p101 = por %p99, %p100
      %p102 = scmp.ne.s32.totalorder %s90, %s91
      %p103 = scmp.eq.s32.totalorder %s18, 5
      %p104 = por %p102, %p103
      %p106 = scmp.ne.s32.totalorder %s91, %s105
      %p107 = scmp.eq.s32.totalorder %s18, 0
      %p108 = por %p106, %p107
      %s109 = smul.u32 %s19, 3
      %s110 = sadd.s32 %s109, %s21
      %s111 = smul.u32 %s38, 3
      %s112 = sadd.s32 %s111, %s30
      %s113 = ssub.s32 %s110, %s112
      %s114 = ssub.s32 %s20, %s34
      %s115 = sor.u32 %s113, %s114
      %p116 = scmp.eq.s32.totalorder %s115, 0
      %s118 = sadd.s32 %s117, 1
      %s119 = scalar_select %p116, %s117, %s118
      %p122 = pneg %p116
      %p123 = scmp.eq.s32.totalorder %s12, 5
      %p124 = por %p122, %p123
      %p125 = scmp.ne.s32.totalorder %s117, %s120
      %p126 = scmp.eq.s32.totalorder %s12, 0
      %p127 = por %p125, %p126
      %p128 = scmp.ne.s32.totalorder %s117, %s120
      %p129 = scmp.eq.s32.totalorder %s17, 5
      %p130 = por %p128, %p129
      %p131 = scmp.ne.s32.totalorder %s120, %s121
      %p132 = scmp.eq.s32.totalorder %s17, 0
      %p133 = por %p131, %p132
      %p134 = scmp.ne.s32.totalorder %s120, %s121
      %p135 = scmp.eq.s32.totalorder %s18, 5
      %p136 = por %p134, %p135
      %p138 = scmp.ne.s32.totalorder %s121, %s137
      %p139 = scmp.eq.s32.totalorder %s18, 0
      %p140 = por %p138, %p139
      %p141 = scmp.le.s32.totalorder 1, %s12
      %p142 = scmp.lt.s32.totalorder %s12, 7
      %p143 = pnand %p141, %p142
      %p144 = pneg %p143
      // Predicated region
      $region9: #{tpu_custom_call.1} parent=5 // pred_check
        _
      $region10: #{tpu_custom_call.1} parent=5 // pred_check_branch
        %146 = sbr.rel (%p143) target = $region12
      $region11: #{tpu_custom_call.1} parent=5 // pred_region
        %s147 = ssub.s32 %s12, 1
        // Predicated region
        $region13: #{tpu_custom_call.1} parent=11 // pred_check
          %p148 = pneg %p80
        $region14: #{tpu_custom_call.1} parent=11 // pred_check_branch
          %150 = sbr.rel (%p148) target = $region16
        $region15: #{tpu_custom_call.1} parent=11 // pred_region
          _
        $region16: #{tpu_custom_call.1} parent=11 // pred_fallthru
          _
        // Predicated region
        $region17: #{tpu_custom_call.1} parent=11 // pred_check
          %p151 = pneg %p101
        $region18: #{tpu_custom_call.1} parent=11 // pred_check_branch
          %153 = sbr.rel (%p151) target = $region20
        $region19: #{tpu_custom_call.1} parent=11 // pred_region
          _
        $region20: #{tpu_custom_call.1} parent=11 // pred_fallthru
          _
      $region12: #{tpu_custom_call.1} parent=5 // pred_fallthru
        _
      %p154 = scmp.lt.s32.totalorder %s12, 6
      // Predicated region
      $region21: #{tpu_custom_call.1} parent=5 // pred_check
        %p155 = pneg %p154
      $region22: #{tpu_custom_call.1} parent=5 // pred_check_branch
        %157 = sbr.rel (%p155) target = $region24
      $region23: #{tpu_custom_call.1} parent=5 // pred_region
        // Predicated region
        $region25: #{tpu_custom_call.1} parent=23 // pred_check
          %p158 = pneg %p53
        $region26: #{tpu_custom_call.1} parent=23 // pred_check_branch
          %160 = sbr.rel (%p158) target = $region28
        $region27: #{tpu_custom_call.1} parent=23 // pred_region
          %p161 = scmp.lt.s32.totalorder %s19, 1
          %s162 = scalar_select %p161, %s19, 1
          %p163 = scmp.lt.s32.totalorder %s20, 0
          %s164 = scalar_select %p163, %s20, 0
          %s165 = smul.addr %s164, 8
          %s166 = smul.addr %s162, 8
          %s167 = sadd.s32 %s165, %s166
          %s168 = smul.addr %s167, 8
          %s169 = scalar_lea.vmem %s0, %s168
        $region28: #{tpu_custom_call.1} parent=23 // pred_fallthru
          _
      $region24: #{tpu_custom_call.1} parent=5 // pred_fallthru
        _
      %p170 = scmp.le.s32.totalorder 1, %s12
      %p171 = scmp.lt.s32.totalorder %s12, 7
      %p172 = pnand %p170, %p171
      %p173 = pneg %p172
      // Predicated region
      $region29: #{tpu_custom_call.1} parent=5 // pred_check
        _
      $region30: #{tpu_custom_call.1} parent=5 // pred_check_branch
        %175 = sbr.rel (%p172) target = $region32
      $region31: #{tpu_custom_call.1} parent=5 // pred_region
        %s176 = ssub.s32 %s12, 1
        %p177 = scmp.lt.s32.totalorder %s22, 1
        %s178 = scalar_select %p177, %s22, 1
        %p179 = scmp.lt.s32.totalorder %s23, 0
        %s180 = scalar_select %p179, %s23, 0
        %s181 = smul.addr %s180, 8
        %s182 = smul.addr %s178, 8
        %s183 = sadd.s32 %s181, %s182
        %s184 = smul.addr %s183, 8
        %s185 = scalar_lea.vmem %s0, %s184
        %p186 = pneg %p59
        %p187 = pneg %p56
        %p188 = pneg %p80
        %p189 = pneg %p77
        %p190 = pneg %p101
        %p191 = pneg %p98
        %p192 = pneg %p133
        %p193 = pneg %p130
        %s194 = sand.u32 %s120, 1
        %s195 = scalar_lea.sflag [#allocation4], %s194
        %s196 = sand.u32 %s120, 1
        %s197 = smul.addr %s196, 8
        %s198 = scalar_lea.vmem [#allocation3], %s197
        %p199 = scmp.lt.s32.totalorder %s22, 1
        %s200 = scalar_select %p199, %s22, 1
        %p201 = scmp.lt.s32.totalorder %s23, 0
        %s202 = scalar_select %p201, %s23, 0
        %s203 = smul.addr %s202, 8
        %s204 = smul.addr %s200, 8
        %s205 = sadd.s32 %s203, %s204
        %s206 = smul.addr %s205, 8
        %s207 = scalar_lea.vmem %s0, %s206
        %s208 = smul.u32 %s22, 3
        %s209 = sadd.s32 %s208, %s24
        %p211 = scmp.eq.s32.totalorder %s24, 0
        // Predicated region
        $region33: #{tpu_custom_call.1} parent=31 // pred_check
          %p212 = pneg %p211
        $region34: #{tpu_custom_call.1} parent=31 // pred_check_branch
          %214 = sbr.rel (%p212) target = $region36
        $region35: #{tpu_custom_call.1} parent=31 // pred_region
          %v215 = vld [vmem:[%s207] sm:$0xff]
          %v216 = vld [vmem:[%s207 + $0x8] sm:$0xff]
          %v217 = vld [vmem:[%s207 + $0x10] sm:$0xff]
          %v218 = vld [vmem:[%s207 + $0x18] sm:$0xff]
          %v219 = vld [vmem:[%s207 + $0x20] sm:$0xff]
          %v220 = vld [vmem:[%s207 + $0x28] sm:$0xff]
          %v221 = vld [vmem:[%s207 + $0x30] sm:$0xff]
          %v222 = vld [vmem:[%s207 + $0x38] sm:$0xff]
          %v223 = vpack.c.bf16 %v215, %v215
          %v224 = vpack.c.bf16 %v216, %v216
          %v225 = vpack.c.bf16 %v217, %v217
          %v226 = vpack.c.bf16 %v218, %v218
          %v227 = vpack.c.bf16 %v219, %v219
          %v228 = vpack.c.bf16 %v220, %v220
          %v229 = vpack.c.bf16 %v221, %v221
          %v230 = vpack.c.bf16 %v222, %v222
          %v231 = vld [vmem:[%s1] sm:$0xf]
          %v232 = vld [vmem:[%s1 + $0x4] sm:$0xf]
          %v233 = vld [vmem:[%s1 + $0x8] sm:$0xf]
          %v234 = vld [vmem:[%s1 + $0xc] sm:$0xf]
          %v235 = vld [vmem:[%s1 + $0x10] sm:$0xf]
          %v236 = vld [vmem:[%s1 + $0x14] sm:$0xf]
          %v237 = vld [vmem:[%s1 + $0x18] sm:$0xf]
          %v238 = vld [vmem:[%s1 + $0x1c] sm:$0xf]
          %v239 = vld [vmem:[%s1 + $0x20] sm:$0xf]
          %v240 = vld [vmem:[%s1 + $0x24] sm:$0xf]
          %v241 = vld [vmem:[%s1 + $0x28] sm:$0xf]
          %v242 = vld [vmem:[%s1 + $0x2c] sm:$0xf]
          %v243 = vld [vmem:[%s1 + $0x30] sm:$0xf]
          %v244 = vld [vmem:[%s1 + $0x34] sm:$0xf]
          %v245 = vld [vmem:[%s1 + $0x38] sm:$0xf]
          %v246 = vld [vmem:[%s1 + $0x3c] sm:$0xf]
          %v247 = vld [vmem:[%s1 + $0x40] sm:$0xf]
          %v248 = vld [vmem:[%s1 + $0x44] sm:$0xf]
          %v249 = vld [vmem:[%s1 + $0x48] sm:$0xf]
          %v250 = vld [vmem:[%s1 + $0x4c] sm:$0xf]
          %v251 = vld [vmem:[%s1 + $0x50] sm:$0xf]
          %v252 = vld [vmem:[%s1 + $0x54] sm:$0xf]
          %v253 = vld [vmem:[%s1 + $0x58] sm:$0xf]
          %v254 = vld [vmem:[%s1 + $0x5c] sm:$0xf]
          %v255 = vld [vmem:[%s1 + $0x60] sm:$0xf]
          %v256 = vld [vmem:[%s1 + $0x64] sm:$0xf]
          %v257 = vld [vmem:[%s1 + $0x68] sm:$0xf]
          %v258 = vld [vmem:[%s1 + $0x6c] sm:$0xf]
          %v259 = vld [vmem:[%s1 + $0x70] sm:$0xf]
          %v260 = vld [vmem:[%s1 + $0x74] sm:$0xf]
          %v261 = vld [vmem:[%s1 + $0x78] sm:$0xf]
          %v262 = vld [vmem:[%s1 + $0x7c] sm:$0xf]
          %v263 = vld [vmem:[%s1 + $0x80] sm:$0xf]
          %v264 = vld [vmem:[%s1 + $0x84] sm:$0xf]
          %v265 = vld [vmem:[%s1 + $0x88] sm:$0xf]
          %v266 = vld [vmem:[%s1 + $0x8c] sm:$0xf]
          %v267 = vld [vmem:[%s1 + $0x90] sm:$0xf]
          %v268 = vld [vmem:[%s1 + $0x94] sm:$0xf]
          %v269 = vld [vmem:[%s1 + $0x98] sm:$0xf]
          %v270 = vld [vmem:[%s1 + $0x9c] sm:$0xf]
          %v271 = vld [vmem:[%s1 + $0xa0] sm:$0xf]
          %v272 = vld [vmem:[%s1 + $0xa4] sm:$0xf]
          %v273 = vld [vmem:[%s1 + $0xa8] sm:$0xf]
          %v274 = vld [vmem:[%s1 + $0xac] sm:$0xf]
          %v275 = vld [vmem:[%s1 + $0xb0] sm:$0xf]
          %v276 = vld [vmem:[%s1 + $0xb4] sm:$0xf]
          %v277 = vld [vmem:[%s1 + $0xb8] sm:$0xf]
          %v278 = vld [vmem:[%s1 + $0xbc] sm:$0xf]
          %v279 = vld [vmem:[%s1 + $0xc0] sm:$0xf]
          %v280 = vld [vmem:[%s1 + $0xc4] sm:$0xf]
          %v281 = vld [vmem:[%s1 + $0xc8] sm:$0xf]
          %v282 = vld [vmem:[%s1 + $0xcc] sm:$0xf]
          %v283 = vld [vmem:[%s1 + $0xd0] sm:$0xf]
          %v284 = vld [vmem:[%s1 + $0xd4] sm:$0xf]
          %v285 = vld [vmem:[%s1 + $0xd8] sm:$0xf]
          %v286 = vld [vmem:[%s1 + $0xdc] sm:$0xf]
          %v287 = vld [vmem:[%s1 + $0xe0] sm:$0xf]
          %v288 = vld [vmem:[%s1 + $0xe4] sm:$0xf]
          %v289 = vld [vmem:[%s1 + $0xe8] sm:$0xf]
          %v290 = vld [vmem:[%s1 + $0xec] sm:$0xf]
          %v291 = vld [vmem:[%s1 + $0xf0] sm:$0xf]
          %v292 = vld [vmem:[%s1 + $0xf4] sm:$0xf]
          %v293 = vld [vmem:[%s1 + $0xf8] sm:$0xf]
          %v294 = vld [vmem:[%s1 + $0xfc] sm:$0xf]
          %v295 = vld [vmem:[%s1 + $0x100] sm:$0xf]
          %v296 = vld [vmem:[%s1 + $0x104] sm:$0xf]
          %v297 = vld [vmem:[%s1 + $0x108] sm:$0xf]
          %v298 = vld [vmem:[%s1 + $0x10c] sm:$0xf]
          %v299 = vld [vmem:[%s1 + $0x110] sm:$0xf]
          %v300 = vld [vmem:[%s1 + $0x114] sm:$0xf]
          %v301 = vld [vmem:[%s1 + $0x118] sm:$0xf]
          %v302 = vld [vmem:[%s1 + $0x11c] sm:$0xf]
          %v303 = vld [vmem:[%s1 + $0x120] sm:$0xf]
          %v304 = vld [vmem:[%s1 + $0x124] sm:$0xf]
          %v305 = vld [vmem:[%s1 + $0x128] sm:$0xf]
          %v306 = vld [vmem:[%s1 + $0x12c] sm:$0xf]
          %v307 = vld [vmem:[%s1 + $0x130] sm:$0xf]
          %v308 = vld [vmem:[%s1 + $0x134] sm:$0xf]
          %v309 = vld [vmem:[%s1 + $0x138] sm:$0xf]
          %v310 = vld [vmem:[%s1 + $0x13c] sm:$0xf]
          %v311 = vld [vmem:[%s1 + $0x140] sm:$0xf]
          %v312 = vld [vmem:[%s1 + $0x144] sm:$0xf]
          %v313 = vld [vmem:[%s1 + $0x148] sm:$0xf]
          %v314 = vld [vmem:[%s1 + $0x14c] sm:$0xf]
          %v315 = vld [vmem:[%s1 + $0x150] sm:$0xf]
          %v316 = vld [vmem:[%s1 + $0x154] sm:$0xf]
          %v317 = vld [vmem:[%s1 + $0x158] sm:$0xf]
          %v318 = vld [vmem:[%s1 + $0x15c] sm:$0xf]
          %v319 = vld [vmem:[%s1 + $0x160] sm:$0xf]
          %v320 = vld [vmem:[%s1 + $0x164] sm:$0xf]
          %v321 = vld [vmem:[%s1 + $0x168] sm:$0xf]
          %v322 = vld [vmem:[%s1 + $0x16c] sm:$0xf]
          %v323 = vld [vmem:[%s1 + $0x170] sm:$0xf]
          %v324 = vld [vmem:[%s1 + $0x174] sm:$0xf]
          %v325 = vld [vmem:[%s1 + $0x178] sm:$0xf]
          %v326 = vld [vmem:[%s1 + $0x17c] sm:$0xf]
          %v327 = vld [vmem:[%s1 + $0x180] sm:$0xf]
          %v328 = vld [vmem:[%s1 + $0x184] sm:$0xf]
          %v329 = vld [vmem:[%s1 + $0x188] sm:$0xf]
          %v330 = vld [vmem:[%s1 + $0x18c] sm:$0xf]
          %v331 = vld [vmem:[%s1 + $0x190] sm:$0xf]
          %v332 = vld [vmem:[%s1 + $0x194] sm:$0xf]
          %v333 = vld [vmem:[%s1 + $0x198] sm:$0xf]
          %v334 = vld [vmem:[%s1 + $0x19c] sm:$0xf]
          %v335 = vld [vmem:[%s1 + $0x1a0] sm:$0xf]
          %v336 = vld [vmem:[%s1 + $0x1a4] sm:$0xf]
          %v337 = vld [vmem:[%s1 + $0x1a8] sm:$0xf]
          %v338 = vld [vmem:[%s1 + $0x1ac] sm:$0xf]
          %v339 = vld [vmem:[%s1 + $0x1b0] sm:$0xf]
          %v340 = vld [vmem:[%s1 + $0x1b4] sm:$0xf]
          %v341 = vld [vmem:[%s1 + $0x1b8] sm:$0xf]
          %v342 = vld [vmem:[%s1 + $0x1bc] sm:$0xf]
          %v343 = vld [vmem:[%s1 + $0x1c0] sm:$0xf]
          %v344 = vld [vmem:[%s1 + $0x1c4] sm:$0xf]
          %v345 = vld [vmem:[%s1 + $0x1c8] sm:$0xf]
          %v346 = vld [vmem:[%s1 + $0x1cc] sm:$0xf]
          %v347 = vld [vmem:[%s1 + $0x1d0] sm:$0xf]
          %v348 = vld [vmem:[%s1 + $0x1d4] sm:$0xf]
          %v349 = vld [vmem:[%s1 + $0x1d8] sm:$0xf]
          %v350 = vld [vmem:[%s1 + $0x1dc] sm:$0xf]
          %v351 = vld [vmem:[%s1 + $0x1e0] sm:$0xf]
          %v352 = vld [vmem:[%s1 + $0x1e4] sm:$0xf]
          %v353 = vld [vmem:[%s1 + $0x1e8] sm:$0xf]
          %v354 = vld [vmem:[%s1 + $0x1ec] sm:$0xf]
          %v355 = vld [vmem:[%s1 + $0x1f0] sm:$0xf]
          %v356 = vld [vmem:[%s1 + $0x1f4] sm:$0xf]
          %v357 = vld [vmem:[%s1 + $0x1f8] sm:$0xf]
          %v358 = vld [vmem:[%s1 + $0x1fc] sm:$0xf]
          %v359 = vld [vmem:[%s2] sm:$0x1]
          %v361 = vlaneseq
          %v362 = vshrl.u32 %v361, 7
          %v363 = vsub.s32 0, %v362
          %v364 = vrot.slane %v359, %v363
          %v494 = vunpack.c.l.b16 %v231
          %v495 = vunpack.c.l.b16 %v232
          %v496 = vunpack.c.l.b16 %v233
          %v497 = vunpack.c.l.b16 %v234
          %v498 = vunpack.c.l.b16 %v235
          %v499 = vunpack.c.l.b16 %v236
          %v500 = vunpack.c.l.b16 %v237
          %v501 = vunpack.c.l.b16 %v238
          %v502 = vunpack.c.l.b16 %v239
          %v503 = vunpack.c.l.b16 %v240
          %v504 = vunpack.c.l.b16 %v241
          %v505 = vunpack.c.l.b16 %v242
          %v506 = vunpack.c.l.b16 %v243
          %v507 = vunpack.c.l.b16 %v244
          %v508 = vunpack.c.l.b16 %v245
          %v509 = vunpack.c.l.b16 %v246
          %v510 = vunpack.c.l.b16 %v247
          %v511 = vunpack.c.l.b16 %v248
          %v512 = vunpack.c.l.b16 %v249
          %v513 = vunpack.c.l.b16 %v250
          %v514 = vunpack.c.l.b16 %v251
          %v515 = vunpack.c.l.b16 %v252
          %v516 = vunpack.c.l.b16 %v253
          %v517 = vunpack.c.l.b16 %v254
          %v518 = vunpack.c.l.b16 %v255
          %v519 = vunpack.c.l.b16 %v256
          %v520 = vunpack.c.l.b16 %v257
          %v521 = vunpack.c.l.b16 %v258
          %v522 = vunpack.c.l.b16 %v259
          %v523 = vunpack.c.l.b16 %v260
          %v524 = vunpack.c.l.b16 %v261
          %v525 = vunpack.c.l.b16 %v262
          %v526 = vunpack.c.l.b16 %v263
          %v527 = vunpack.c.l.b16 %v264
          %v528 = vunpack.c.l.b16 %v265
          %v529 = vunpack.c.l.b16 %v266
          %v530 = vunpack.c.l.b16 %v267
          %v531 = vunpack.c.l.b16 %v268
          %v532 = vunpack.c.l.b16 %v269
          %v533 = vunpack.c.l.b16 %v270
          %v534 = vunpack.c.l.b16 %v271
          %v535 = vunpack.c.l.b16 %v272
          %v536 = vunpack.c.l.b16 %v273
          %v537 = vunpack.c.l.b16 %v274
          %v538 = vunpack.c.l.b16 %v275
          %v539 = vunpack.c.l.b16 %v276
          %v540 = vunpack.c.l.b16 %v277
          %v541 = vunpack.c.l.b16 %v278
          %v542 = vunpack.c.l.b16 %v279
          %v543 = vunpack.c.l.b16 %v280
          %v544 = vunpack.c.l.b16 %v281
          %v545 = vunpack.c.l.b16 %v282
          %v546 = vunpack.c.l.b16 %v283
          %v547 = vunpack.c.l.b16 %v284
          %v548 = vunpack.c.l.b16 %v285
          %v549 = vunpack.c.l.b16 %v286
          %v550 = vunpack.c.l.b16 %v287
          %v551 = vunpack.c.l.b16 %v288
          %v552 = vunpack.c.l.b16 %v289
          %v553 = vunpack.c.l.b16 %v290
          %v554 = vunpack.c.l.b16 %v291
          %v555 = vunpack.c.l.b16 %v292
          %v556 = vunpack.c.l.b16 %v293
          %v557 = vunpack.c.l.b16 %v294
          %v558 = vunpack.c.l.b16 %v295
          %v559 = vunpack.c.l.b16 %v296
          %v560 = vunpack.c.l.b16 %v297
          %v561 = vunpack.c.l.b16 %v298
          %v562 = vunpack.c.l.b16 %v299
          %v563 = vunpack.c.l.b16 %v300
          %v564 = vunpack.c.l.b16 %v301
          %v565 = vunpack.c.l.b16 %v302
          %v566 = vunpack.c.l.b16 %v303
          %v567 = vunpack.c.l.b16 %v304
          %v568 = vunpack.c.l.b16 %v305
          %v569 = vunpack.c.l.b16 %v306
          %v570 = vunpack.c.l.b16 %v307
          %v571 = vunpack.c.l.b16 %v308
          %v572 = vunpack.c.l.b16 %v309
          %v573 = vunpack.c.l.b16 %v310
          %v574 = vunpack.c.l.b16 %v311
          %v575 = vunpack.c.l.b16 %v312
          %v576 = vunpack.c.l.b16 %v313
          %v577 = vunpack.c.l.b16 %v314
          %v578 = vunpack.c.l.b16 %v315
          %v579 = vunpack.c.l.b16 %v316
          %v580 = vunpack.c.l.b16 %v317
          %v581 = vunpack.c.l.b16 %v318
          %v582 = vunpack.c.l.b16 %v319
          %v583 = vunpack.c.l.b16 %v320
          %v584 = vunpack.c.l.b16 %v321
          %v585 = vunpack.c.l.b16 %v322
          %v586 = vunpack.c.l.b16 %v323
          %v587 = vunpack.c.l.b16 %v324
          %v588 = vunpack.c.l.b16 %v325
          %v589 = vunpack.c.l.b16 %v326
          %v590 = vunpack.c.l.b16 %v327
          %v591 = vunpack.c.l.b16 %v328
          %v592 = vunpack.c.l.b16 %v329
          %v593 = vunpack.c.l.b16 %v330
          %v594 = vunpack.c.l.b16 %v331
          %v595 = vunpack.c.l.b16 %v332
          %v596 = vunpack.c.l.b16 %v333
          %v597 = vunpack.c.l.b16 %v334
          %v598 = vunpack.c.l.b16 %v335
          %v599 = vunpack.c.l.b16 %v336
          %v600 = vunpack.c.l.b16 %v337
          %v601 = vunpack.c.l.b16 %v338
          %v602 = vunpack.c.l.b16 %v339
          %v603 = vunpack.c.l.b16 %v340
          %v604 = vunpack.c.l.b16 %v341
          %v605 = vunpack.c.l.b16 %v342
          %v606 = vunpack.c.l.b16 %v343
          %v607 = vunpack.c.l.b16 %v344
          %v608 = vunpack.c.l.b16 %v345
          %v609 = vunpack.c.l.b16 %v346
          %v610 = vunpack.c.l.b16 %v347
          %v611 = vunpack.c.l.b16 %v348
          %v612 = vunpack.c.l.b16 %v349
          %v613 = vunpack.c.l.b16 %v350
          %v614 = vunpack.c.l.b16 %v351
          %v615 = vunpack.c.l.b16 %v352
          %v616 = vunpack.c.l.b16 %v353
          %v617 = vunpack.c.l.b16 %v354
          %v618 = vunpack.c.l.b16 %v355
          %v619 = vunpack.c.l.b16 %v356
          %v620 = vunpack.c.l.b16 %v357
          %v621 = vunpack.c.l.b16 %v358
          %v622 = vpack.c.b16 %v495, %v494
          %v623 = vpack.c.b16 %v497, %v496
          %v624 = vpack.c.b16 %v499, %v498
          %v625 = vpack.c.b16 %v501, %v500
          %v626 = vpack.c.b16 %v503, %v502
          %v627 = vpack.c.b16 %v505, %v504
          %v628 = vpack.c.b16 %v507, %v506
          %v629 = vpack.c.b16 %v509, %v508
          %v630 = vpack.c.b16 %v511, %v510
          %v631 = vpack.c.b16 %v513, %v512
          %v632 = vpack.c.b16 %v515, %v514
          %v633 = vpack.c.b16 %v517, %v516
          %v634 = vpack.c.b16 %v519, %v518
          %v635 = vpack.c.b16 %v521, %v520
          %v636 = vpack.c.b16 %v523, %v522
          %v637 = vpack.c.b16 %v525, %v524
          %v638 = vpack.c.b16 %v527, %v526
          %v639 = vpack.c.b16 %v529, %v528
          %v640 = vpack.c.b16 %v531, %v530
          %v641 = vpack.c.b16 %v533, %v532
          %v642 = vpack.c.b16 %v535, %v534
          %v643 = vpack.c.b16 %v537, %v536
          %v644 = vpack.c.b16 %v539, %v538
          %v645 = vpack.c.b16 %v541, %v540
          %v646 = vpack.c.b16 %v543, %v542
          %v647 = vpack.c.b16 %v545, %v544
          %v648 = vpack.c.b16 %v547, %v546
          %v649 = vpack.c.b16 %v549, %v548
          %v650 = vpack.c.b16 %v551, %v550
          %v651 = vpack.c.b16 %v553, %v552
          %v652 = vpack.c.b16 %v555, %v554
          %v653 = vpack.c.b16 %v557, %v556
          %v654 = vpack.c.b16 %v559, %v558
          %v655 = vpack.c.b16 %v561, %v560
          %v656 = vpack.c.b16 %v563, %v562
          %v657 = vpack.c.b16 %v565, %v564
          %v658 = vpack.c.b16 %v567, %v566
          %v659 = vpack.c.b16 %v569, %v568
          %v660 = vpack.c.b16 %v571, %v570
          %v661 = vpack.c.b16 %v573, %v572
          %v662 = vpack.c.b16 %v575, %v574
          %v663 = vpack.c.b16 %v577, %v576
          %v664 = vpack.c.b16 %v579, %v578
          %v665 = vpack.c.b16 %v581, %v580
          %v666 = vpack.c.b16 %v583, %v582
          %v667 = vpack.c.b16 %v585, %v584
          %v668 = vpack.c.b16 %v587, %v586
          %v669 = vpack.c.b16 %v589, %v588
          %v670 = vpack.c.b16 %v591, %v590
          %v671 = vpack.c.b16 %v593, %v592
          %v672 = vpack.c.b16 %v595, %v594
          %v673 = vpack.c.b16 %v597, %v596
          %v674 = vpack.c.b16 %v599, %v598
          %v675 = vpack.c.b16 %v601, %v600
          %v676 = vpack.c.b16 %v603, %v602
          %v677 = vpack.c.b16 %v605, %v604
          %v678 = vpack.c.b16 %v607, %v606
          %v679 = vpack.c.b16 %v609, %v608
          %v680 = vpack.c.b16 %v611, %v610
          %v681 = vpack.c.b16 %v613, %v612
          %v682 = vpack.c.b16 %v615, %v614
          %v683 = vpack.c.b16 %v617, %v616
          %v684 = vpack.c.b16 %v619, %v618
          %v685 = vpack.c.b16 %v621, %v620
          %750 = vmatprep.subr.bf16.mxu0 0
          %751 = vmatpush1.bf16.msra.mxu0 %v629
          %752 = vmatprep.subr.bf16.mxu0 0
          %753 = vmatpush1.bf16.msra.mxu0 %v628
          %754 = vmatprep.subr.bf16.mxu0 0
          %755 = vmatpush1.bf16.msra.mxu0 %v627
          %756 = vmatprep.subr.bf16.mxu0 0
          %757 = vmatpush1.bf16.msra.mxu0 %v626
          %758 = vmatprep.subr.bf16.mxu0 0
          %759 = vmatpush1.bf16.msra.mxu0 %v625
          %760 = vmatprep.subr.bf16.mxu0 0
          %761 = vmatpush1.bf16.msra.mxu0 %v624
          %762 = vmatprep.subr.bf16.mxu0 0
          %763 = vmatpush1.bf16.msra.mxu0 %v623
          %764 = vmatprep.subr.bf16.mxu0 0
          %765 = vmatpush1.bf16.msra.mxu0 %v622
          %766 = vmatprep.subr.bf16.mxu0 0
          %767 = vmatpush2.bf16.msra.mxu0 %v637
          %768 = vmatprep.subr.bf16.mxu0 0
          %769 = vmatpush2.bf16.msra.mxu0 %v636
          %770 = vmatprep.subr.bf16.mxu0 0
          %771 = vmatpush2.bf16.msra.mxu0 %v635
          %772 = vmatprep.subr.bf16.mxu0 0
          %773 = vmatpush2.bf16.msra.mxu0 %v634
          %774 = vmatprep.subr.bf16.mxu0 0
          %775 = vmatpush2.bf16.msra.mxu0 %v633
          %776 = vmatprep.subr.bf16.mxu0 0
          %777 = vmatpush2.bf16.msra.mxu0 %v632
          %778 = vmatprep.subr.bf16.mxu0 0
          %779 = vmatpush2.bf16.msra.mxu0 %v631
          %780 = vmatprep.subr.bf16.mxu0 0
          %781 = vmatpush2.bf16.msra.mxu0 %v630
          %782 = vmatprep.mubr.bf16.mxu0 %v224
          %783 = vmatmul.mubr.bf16.gmra.mxu0 %v223
          %v784 = vpop.f32.mrf.mxu0
          %v785 = vadd.f32 %v364, %v784
          %v786 = vpop.f32.mrf.mxu0
          %v787 = vpop.f32.mrf.mxu0
          %v788 = vpop.f32.mrf.mxu0
          %789 = vdwg.mxu0
          %790 = vmatprep.subr.bf16.mxu0 0
          %791 = vmatpush1.bf16.msra.mxu0 %v645
          %792 = vmatprep.subr.bf16.mxu0 0
          %793 = vmatpush1.bf16.msra.mxu0 %v644
          %794 = vmatprep.subr.bf16.mxu0 0
          %795 = vmatpush1.bf16.msra.mxu0 %v643
          %796 = vmatprep.subr.bf16.mxu0 0
          %797 = vmatpush1.bf16.msra.mxu0 %v642
          %798 = vmatprep.subr.bf16.mxu0 0
          %799 = vmatpush1.bf16.msra.mxu0 %v641
          %800 = vmatprep.subr.bf16.mxu0 0
          %801 = vmatpush1.bf16.msra.mxu0 %v640
          %802 = vmatprep.subr.bf16.mxu0 0
          %803 = vmatpush1.bf16.msra.mxu0 %v639
          %804 = vmatprep.subr.bf16.mxu0 0
          %805 = vmatpush1.bf16.msra.mxu0 %v638
          %806 = vmatprep.subr.bf16.mxu0 0
          %807 = vmatpush2.bf16.msra.mxu0 %v653
          %808 = vmatprep.subr.bf16.mxu0 0
          %809 = vmatpush2.bf16.msra.mxu0 %v652
          %810 = vmatprep.subr.bf16.mxu0 0
          %811 = vmatpush2.bf16.msra.mxu0 %v651
          %812 = vmatprep.subr.bf16.mxu0 0
          %813 = vmatpush2.bf16.msra.mxu0 %v650
          %814 = vmatprep.subr.bf16.mxu0 0
          %815 = vmatpush2.bf16.msra.mxu0 %v649
          %816 = vmatprep.subr.bf16.mxu0 0
          %817 = vmatpush2.bf16.msra.mxu0 %v648
          %818 = vmatprep.subr.bf16.mxu0 0
          %819 = vmatpush2.bf16.msra.mxu0 %v647
          %820 = vmatprep.subr.bf16.mxu0 0
          %821 = vmatpush2.bf16.msra.mxu0 %v646
          %822 = vmatprep.mubr.bf16.mxu0 %v226
          %823 = vmatmul.mubr.bf16.gmra.mxu0 %v225
          %v824 = vpop.f32.mrf.mxu0
          %v825 = vadd.f32 %v785, %v824
          %v826 = vpop.f32.mrf.mxu0
          %v827 = vpop.f32.mrf.mxu0
          %v828 = vpop.f32.mrf.mxu0
          %829 = vdwg.mxu0
          %830 = vmatprep.subr.bf16.mxu0 0
          %831 = vmatpush1.bf16.msra.mxu0 %v661
          %832 = vmatprep.subr.bf16.mxu0 0
          %833 = vmatpush1.bf16.msra.mxu0 %v660
          %834 = vmatprep.subr.bf16.mxu0 0
          %835 = vmatpush1.bf16.msra.mxu0 %v659
          %836 = vmatprep.subr.bf16.mxu0 0
          %837 = vmatpush1.bf16.msra.mxu0 %v658
          %838 = vmatprep.subr.bf16.mxu0 0
          %839 = vmatpush1.bf16.msra.mxu0 %v657
          %840 = vmatprep.subr.bf16.mxu0 0
          %841 = vmatpush1.bf16.msra.mxu0 %v656
          %842 = vmatprep.subr.bf16.mxu0 0
          %843 = vmatpush1.bf16.msra.mxu0 %v655
          %844 = vmatprep.subr.bf16.mxu0 0
          %845 = vmatpush1.bf16.msra.mxu0 %v654
          %846 = vmatprep.subr.bf16.mxu0 0
          %847 = vmatpush2.bf16.msra.mxu0 %v669
          %848 = vmatprep.subr.bf16.mxu0 0
          %849 = vmatpush2.bf16.msra.mxu0 %v668
          %850 = vmatprep.subr.bf16.mxu0 0
          %851 = vmatpush2.bf16.msra.mxu0 %v667
          %852 = vmatprep.subr.bf16.mxu0 0
          %853 = vmatpush2.bf16.msra.mxu0 %v666
          %854 = vmatprep.subr.bf16.mxu0 0
          %855 = vmatpush2.bf16.msra.mxu0 %v665
          %856 = vmatprep.subr.bf16.mxu0 0
          %857 = vmatpush2.bf16.msra.mxu0 %v664
          %858 = vmatprep.subr.bf16.mxu0 0
          %859 = vmatpush2.bf16.msra.mxu0 %v663
          %860 = vmatprep.subr.bf16.mxu0 0
          %861 = vmatpush2.bf16.msra.mxu0 %v662
          %862 = vmatprep.mubr.bf16.mxu0 %v228
          %863 = vmatmul.mubr.bf16.gmra.mxu0 %v227
          %v864 = vpop.f32.mrf.mxu0
          %v865 = vadd.f32 %v825, %v864
          %v866 = vpop.f32.mrf.mxu0
          %v867 = vpop.f32.mrf.mxu0
          %v868 = vpop.f32.mrf.mxu0
          %869 = vdwg.mxu0
          %870 = vmatprep.subr.bf16.mxu0 0
          %871 = vmatpush1.bf16.msra.mxu0 %v677
          %872 = vmatprep.subr.bf16.mxu0 0
          %873 = vmatpush1.bf16.msra.mxu0 %v676
          %874 = vmatprep.subr.bf16.mxu0 0
          %875 = vmatpush1.bf16.msra.mxu0 %v675
          %876 = vmatprep.subr.bf16.mxu0 0
          %877 = vmatpush1.bf16.msra.mxu0 %v674
          %878 = vmatprep.subr.bf16.mxu0 0
          %879 = vmatpush1.bf16.msra.mxu0 %v673
          %880 = vmatprep.subr.bf16.mxu0 0
          %881 = vmatpush1.bf16.msra.mxu0 %v672
          %882 = vmatprep.subr.bf16.mxu0 0
          %883 = vmatpush1.bf16.msra.mxu0 %v671
          %884 = vmatprep.subr.bf16.mxu0 0
          %885 = vmatpush1.bf16.msra.mxu0 %v670
          %886 = vmatprep.subr.bf16.mxu0 0
          %887 = vmatpush2.bf16.msra.mxu0 %v685
          %888 = vmatprep.subr.bf16.mxu0 0
          %889 = vmatpush2.bf16.msra.mxu0 %v684
          %890 = vmatprep.subr.bf16.mxu0 0
          %891 = vmatpush2.bf16.msra.mxu0 %v683
          %892 = vmatprep.subr.bf16.mxu0 0
          %893 = vmatpush2.bf16.msra.mxu0 %v682
          %894 = vmatprep.subr.bf16.mxu0 0
          %895 = vmatpush2.bf16.msra.mxu0 %v681
          %896 = vmatprep.subr.bf16.mxu0 0
          %897 = vmatpush2.bf16.msra.mxu0 %v680
          %898 = vmatprep.subr.bf16.mxu0 0
          %899 = vmatpush2.bf16.msra.mxu0 %v679
          %900 = vmatprep.subr.bf16.mxu0 0
          %901 = vmatpush2.bf16.msra.mxu0 %v678
          %902 = vmatprep.mubr.bf16.mxu0 %v230
          %903 = vmatmul.mubr.bf16.gmra.mxu0 %v229
          %v904 = vpop.f32.mrf.mxu0
          %v905 = vadd.f32 %v865, %v904
          %v906 = vpop.f32.mrf.mxu0
          %v907 = vpop.f32.mrf.mxu0
          %v908 = vpop.f32.mrf.mxu0
          %909 = vdwg.mxu0
          %vm910 = vcmask 261120
          %911 = vst.msk [vmem:[#allocation2] sm:$0xff] %vm910, %v905
          %912 = vst.msk [vmem:[%s198] sm:$0xff] %vm910, %v905
        $region36: #{tpu_custom_call.1} parent=31 // pred_fallthru
          _
        %p913 = scmp.ne.s32.totalorder %s24, 0
        // Predicated region
        $region37: #{tpu_custom_call.1} parent=31 // pred_check
          %p914 = pneg %p913
        $region38: #{tpu_custom_call.1} parent=31 // pred_check_branch
          %916 = sbr.rel (%p914) target = $region40
        $region39: #{tpu_custom_call.1} parent=31 // pred_region
          %v917 = vld [vmem:[#allocation2] sm:$0xff]
          %vm918 = vcmask 261120
          %919 = vst.msk [vmem:[%s198] sm:$0xff] %vm918, %v917
        $region40: #{tpu_custom_call.1} parent=31 // pred_fallthru
          _
        %s920 = sand.u32 %s120, 1
        %s921 = scalar_lea.sflag [#allocation4], %s920
        %s922 = sand.u32 %s120, 1
        %s923 = smul.addr %s922, 8
        %s924 = scalar_lea.vmem [#allocation3], %s923
        // Predicated region
        $region41: #{tpu_custom_call.1} parent=31 // pred_check
          %p925 = pneg %p130
        $region42: #{tpu_custom_call.1} parent=31 // pred_check_branch
          %927 = sbr.rel (%p925) target = $region44
        $region43: #{tpu_custom_call.1} parent=31 // pred_region
          %s928 = smul.u32 %s22, 3
          %s929 = sadd.s32 %s928, %s24
          %s931 = ssub.s32 128, 128
          %932 = vsyncadd %s921, %s931
          %s933 = sadd.s32 %s23, %s929
          %s934 = smul.addr %s933, 128
          %s935 = scalar_lea.hbm %s3, %s934
          %s937 = sshll.u32 %s924, 4
          %s938 = int_to_ptr.vmem [resolvable:$true] %s937
          %940 = dma.vmem_to_hbm [thread:$0]  %s938, 128, %s935, %s921
        $region44: #{tpu_custom_call.1} parent=31 // pred_fallthru
          _
      $region32: #{tpu_custom_call.1} parent=5 // pred_fallthru
        _
      %p941 = scmp.le.s32.totalorder 2, %s12
      // Predicated region
      $region45: #{tpu_custom_call.1} parent=5 // pred_check
        %p942 = pneg %p941
      $region46: #{tpu_custom_call.1} parent=5 // pred_check_branch
        %944 = sbr.rel (%p942) target = $region48
      $region47: #{tpu_custom_call.1} parent=5 // pred_region
        %s945 = ssub.s32 %s12, 2
        // Predicated region
        $region49: #{tpu_custom_call.1} parent=47 // pred_check
          %p946 = pneg %p136
        $region50: #{tpu_custom_call.1} parent=47 // pred_check_branch
          %948 = sbr.rel (%p946) target = $region52
        $region51: #{tpu_custom_call.1} parent=47 // pred_region
          %s949 = sand.u32 %s121, 1
          %s950 = scalar_lea.sflag [#allocation4], %s949
          %s951 = sand.u32 %s121, 1
          %s952 = smul.addr %s951, 8
          %s953 = scalar_lea.vmem [#allocation3], %s952
          %954 = dma.done %s950, 128
        $region52: #{tpu_custom_call.1} parent=47 // pred_fallthru
          _
      $region48: #{tpu_custom_call.1} parent=5 // pred_fallthru
        _
    $region6: #{tpu_custom_call.1} parent=1 // loop_footer
      %s16 = sadd.s32 1, %s12
    $region7: #{tpu_custom_call.1} parent=1 // loop_footer_branch
      %11 = sbr.rel target = $region3
    $region8: #{tpu_custom_call.1} parent=1 // loop_exit
      _
    %955 = vsyncpa [#allocation4], 1
    %s956 = scalar_lea.sflag [#allocation4], 1
    %957 = vsyncpa %s956, 1

</llo_original>
